<compile_context>
chip_gen: v6e
topology: v6e:2x2x1
jax: 0.10.0
libtpu: 0.0.40
codegen_flags: <defaults>
</compile_context>

<pallas_src>
import functools

import jax
import jax.numpy as jnp
from jax.experimental import pallas as pl
from jax.experimental.pallas import tpu as pltpu

EPS = 1e-5
LANE = 128
VMEM_LIMIT_DEFAULT = 40 * 1024 * 1024
ROW_TILE_DEFAULT = 2048


def _round_up(v, m):
    return (v + m - 1) // m * m


def _pick_row_tile(ho, wo, target_rows):
    """Largest divisor `th` of ho with th*wo <= target (whole extent if it fits)."""
    if ho * wo <= target_rows:
        return ho
    th = max(1, target_rows // wo)
    while ho % th:
        th -= 1
    return th


def _pick_sub_tile(th, wo, coutp, sub_rows_target=None, *, max_chunks=16):
    """Rows per accumulator chunk: ~128 KiB f32 acc, capped static unroll."""
    if sub_rows_target is None:
        sub_rows_target = max(8, (128 * 1024) // (coutp * 4))
    sub = _pick_row_tile(th, wo, sub_rows_target)
    while th // sub > max_chunks:          # cap compile-time unroll
        sub += 1
        while th % sub:
            sub += 1
    return sub


def _tpu_memory_defaults():
    """Per-generation VMEM limit and row-tile target (v5e/v6e 128 MiB, v7x 64 MiB)."""
    vmem_limit = VMEM_LIMIT_DEFAULT
    row_tile_target = ROW_TILE_DEFAULT
    try:
        cap = pltpu.get_tpu_info().vmem_capacity_bytes
        vmem_limit = min(int(cap * 3 // 4), 100 * 1024 * 1024)
        row_tile_target = 2048 if cap <= 80 * 1024 * 1024 else 6144
    except Exception:
        pass
    return vmem_limit, row_tile_target


# ----------------------------------------------------------------------------- kernels

def _conv_stats_kernel(x_ref, w_ref, y_ref, st_ref, *, taps, th, wo, sub_th):
    """One row tile: implicit-im2col conv (per-tap MXU matmuls, f32 acc, chunked along
    M so the accumulator stays small) + per-channel sum / sum-of-squares for BN."""
    cin = x_ref.shape[-1]
    coutp = w_ref.shape[-1]
    nchunks = th // sub_th
    s1 = jnp.zeros((1, coutp), jnp.float32)
    s2 = jnp.zeros((1, coutp), jnp.float32)
    for c in range(nchunks):                                   # static unroll (<=16)
        r0 = c * sub_th
        acc = jnp.zeros((sub_th * wo, coutp), jnp.float32)
        for idx, (p, dr, dc) in enumerate(taps):               # static unroll (<=9)
            lhs = x_ref[0, p, dr + r0:dr + r0 + sub_th, dc:dc + wo, :]
            acc = acc + jnp.dot(lhs.reshape(sub_th * wo, cin), w_ref[idx],
                                preferred_element_type=jnp.float32)
        y_ref[0, r0:r0 + sub_th, :, :] = acc.reshape(sub_th, wo, coutp).astype(y_ref.dtype)
        s1 = s1 + jnp.sum(acc, axis=0, keepdims=True)
        s2 = s2 + jnp.sum(acc * acc, axis=0, keepdims=True)
    # 8-sublane-padded stats block -> full unmasked store.
    row = jax.lax.broadcasted_iota(jnp.int32, (8, coutp), 0)
    st = jnp.where(row == 0, jnp.broadcast_to(s1, (8, coutp)),
                   jnp.where(row == 1, jnp.broadcast_to(s2, (8, coutp)), 0.0))
    st_ref[0] = st


def _make_affine_kernel(with_residual, relu):
    """y*scale + shift (+ residual) (+ ReLU); folded BN affine, one VPU pass."""
    def kernel(y_ref, sc_ref, sh_ref, *rest):
        if with_residual:
            r_ref, o_ref = rest
        else:
            (o_ref,) = rest
        out = y_ref[...].astype(jnp.float32) * sc_ref[...] + sh_ref[...]
        if with_residual:
            out = out + r_ref[...].astype(jnp.float32)
        if relu:
            out = jnp.maximum(out, 0.0)
        o_ref[...] = out.astype(o_ref.dtype)
    return kernel


# ----------------------------------------------------------------------------- conv+BN

def _conv_bn(x_nhwc, w_oihw, gamma, beta, *, stride, relu, residual=None,
             mxu_dtype=jnp.bfloat16, out_dtype=jnp.float32,
             row_tile_target=ROW_TILE_DEFAULT, sub_rows_target=None,
             vmem_limit_bytes=VMEM_LIMIT_DEFAULT):
    """conv (3x3 pad 1, or 1x1 pad 0) + BatchNorm(train) [+ residual] [+ ReLU].
    Returns (N, Ho, Wo, Coutp) with channels zero-padded to a multiple of 128."""
    n, h, w, cin = x_nhwc.shape
    cout, cin_w, kh, kw = w_oihw.shape
    assert cin_w == cin and kh == kw and kh in (1, 3)
    coutp = _round_up(cout, LANE)

    # ---- phase-stacked input + tap table (all static offsets in-kernel) ----
    if kh == 3:
        ho = (h + 2 - 3) // stride + 1
        wo = (w + 2 - 3) // stride + 1
        xp = jnp.pad(x_nhwc, ((0, 0), (1, 1), (1, 1), (0, 0)))
        if stride == 1:
            xph = xp[:, None]                                  # (N, 1, H+2, W+2, Cin)
            taps = [(0, ki, kj) for ki in range(3) for kj in range(3)]
            halo = 2
        else:                                                  # stride 2 -> 2x2 phases
            hp, wp = h + 2, w + 2
            h2, w2 = -(-hp // 2), -(-wp // 2)
            xpe = jnp.pad(xp, ((0, 0), (0, 2 * h2 - hp), (0, 2 * w2 - wp), (0, 0)))
            xph = jnp.stack([xpe[:, a::2, b::2, :] for a in range(2) for b in range(2)],
                            axis=1)                            # (N, 4, H2, W2, Cin)
            taps = [((ki % 2) * 2 + (kj % 2), ki // 2, kj // 2)
                    for ki in range(3) for kj in range(3)]
            halo = 1
        wmat = jnp.transpose(w_oihw, (2, 3, 1, 0)).reshape(9, cin, cout)
    else:                                                      # 1x1 stride-2 Downsample
        ho = (h - 1) // stride + 1
        wo = (w - 1) // stride + 1
        xph = x_nhwc[:, ::stride, ::stride, :][:, :ho, :wo, :][:, None]
        taps = [(0, 0, 0)]
        halo = 0
        wmat = jnp.transpose(w_oihw, (2, 3, 1, 0)).reshape(1, cin, cout)

    wmat = jnp.pad(wmat, ((0, 0), (0, 0), (0, coutp - cout))).astype(mxu_dtype)

    # ---- row tiling (nt==1 avoids the overlapping-tile copy entirely) ----
    th = _pick_row_tile(ho, wo, row_tile_target)
    nt = ho // th
    th_in = th + halo
    p = xph.shape[1]
    w_in = xph.shape[3]
    if nt == 1:
        assert xph.shape[2] == th_in
        x_tiles = xph.astype(mxu_dtype)                        # single fused cast/copy
    else:
        x_tiles = jnp.stack([xph[:, :, t * th:t * th + th_in] for t in range(nt)],
                            axis=1).reshape(n * nt, p, th_in, w_in, cin).astype(mxu_dtype)
    mt = n * nt
    sub_th = _pick_sub_tile(th, wo, coutp, sub_rows_target)

    cparams = pltpu.CompilerParams(dimension_semantics=("parallel",),
                                   vmem_limit_bytes=vmem_limit_bytes)

    # ---- pass 1: conv + per-tile channel moments (pre-BN y stored in MXU dtype) ----
    y, stats = pl.pallas_call(
        functools.partial(_conv_stats_kernel, taps=tuple(taps), th=th, wo=wo,
                          sub_th=sub_th),
        grid=(mt,),
        in_specs=[
            pl.BlockSpec((1, p, th_in, w_in, cin), lambda m: (m, 0, 0, 0, 0)),
            pl.BlockSpec((len(taps), cin, coutp), lambda m: (0, 0, 0)),
        ],
        out_specs=[
            pl.BlockSpec((1, th, wo, coutp), lambda m: (m, 0, 0, 0)),
            pl.BlockSpec((1, 8, coutp), lambda m: (m, 0, 0)),
        ],
        out_shape=[
            jax.ShapeDtypeStruct((mt, th, wo, coutp), mxu_dtype),
            jax.ShapeDtypeStruct((mt, 8, coutp), jnp.float32),
        ],
        compiler_params=cparams,
    )(x_tiles, wmat)

    # ---- BN finalize (tiny per-channel work in plain JAX): fold into scale/shift ----
    cnt = float(n * ho * wo)
    mean = jnp.sum(stats[:, 0, :], axis=0) / cnt
    var = jnp.maximum(jnp.sum(stats[:, 1, :], axis=0) / cnt - mean * mean, 0.0)
    g = jnp.pad(gamma.astype(jnp.float32), (0, coutp - cout))
    b = jnp.pad(beta.astype(jnp.float32), (0, coutp - cout))
    scale = g / jnp.sqrt(var + EPS)
    shift = b - mean * scale
    scale = scale.reshape(1, 1, 1, coutp)
    shift = shift.reshape(1, 1, 1, coutp)

    # ---- pass 2: affine (+ residual) (+ ReLU), same grid, lane-dense stores ----
    args = [y, scale, shift]
    in_specs = [
        pl.BlockSpec((1, th, wo, coutp), lambda m: (m, 0, 0, 0)),
        pl.BlockSpec((1, 1, 1, coutp), lambda m: (0, 0, 0, 0)),
        pl.BlockSpec((1, 1, 1, coutp), lambda m: (0, 0, 0, 0)),
    ]
    if residual is not None:
        args.append(residual.reshape(mt, th, wo, coutp))
        in_specs.append(pl.BlockSpec((1, th, wo, coutp), lambda m: (m, 0, 0, 0)))

    out = pl.pallas_call(
        _make_affine_kernel(residual is not None, relu),
        grid=(mt,),
        in_specs=in_specs,
        out_specs=pl.BlockSpec((1, th, wo, coutp), lambda m: (m, 0, 0, 0)),
        out_shape=jax.ShapeDtypeStruct((mt, th, wo, coutp), out_dtype),
        compiler_params=cparams,
    )(*args)

    return out.reshape(n, ho, wo, coutp)


# ----------------------------------------------------------------------------- block

def block_forward(x_nchw, params, first_stride, *, mxu_dtype=jnp.bfloat16,
                  row_tile_target=None, sub_rows_target=None, vmem_limit_bytes=None):
    """Pallas implementation of Block.forward. Input/output are NCHW like PyTorch."""
    vmem_default, row_default = _tpu_memory_defaults()
    if vmem_limit_bytes is None:
        vmem_limit_bytes = vmem_default
    if row_tile_target is None:
        row_tile_target = row_default

    x = jnp.transpose(x_nchw, (0, 2, 3, 1)).astype(mxu_dtype)   # NHWC, MXU dtype once
    n, h, w, cin = x.shape
    cout = params["w1"].shape[0]
    coutp = _round_up(cout, LANE)
    kw_args = dict(mxu_dtype=mxu_dtype, row_tile_target=row_tile_target,
                   sub_rows_target=sub_rows_target, vmem_limit_bytes=vmem_limit_bytes)

    # residual branch: Downsample (1x1 s2 conv + BN) or identity (channel-padded)
    if "wd" in params:
        residual = _conv_bn(x, params["wd"], params["gd"], params["btd"],
                            stride=2, relu=False, out_dtype=mxu_dtype, **kw_args)
    else:
        # Standard Block semantics: no Downsample => identity residual, stride must be 1.
        assert first_stride == 1, "identity residual requires first_stride == 1"
        residual = jnp.pad(x, ((0, 0), (0, 0), (0, 0), (0, coutp - cin)))

    # conv1 + bn1 + relu (h1 stays channel-padded, MXU dtype, feeds conv2 directly)
    h1 = _conv_bn(x, params["w1"], params["g1"], params["bt1"],
                  stride=first_stride, relu=True, out_dtype=mxu_dtype, **kw_args)

    # conv2 + bn2 + residual add + relu (residual fused into pass 2)
    w2p = jnp.pad(params["w2"], ((0, 0), (0, coutp - cout), (0, 0), (0, 0)))
    out = _conv_bn(h1, w2p, params["g2"], params["bt2"],
                   stride=1, relu=True, residual=residual,
                   out_dtype=jnp.float32, **kw_args)

    out = out[..., :cout]                                       # drop channel pad
    return jnp.transpose(out, (0, 3, 1, 2))                     # back to NCHW


# ----------------------------------------------------------------------------- reference

def _bn_train_ref(x_nhwc, gamma, beta):
    mean = jnp.mean(x_nhwc, axis=(0, 1, 2))
    var = jnp.mean(jnp.square(x_nhwc - mean), axis=(0, 1, 2))
    return (x_nhwc - mean) / jnp.sqrt(var + EPS) * gamma + beta


def _conv_ref(x_nhwc, w_oihw, bias, stride, padding):
    y = jax.lax.conv_general_dilated(
        x_nhwc, w_oihw, window_strides=(stride, stride),
        padding=[(padding, padding), (padding, padding)],
        dimension_numbers=("NHWC", "OIHW", "NHWC"))
    return y + bias


def block_forward_ref(x_nchw, params, first_stride):
    x = jnp.transpose(x_nchw, (0, 2, 3, 1)).astype(jnp.float32)
    if "wd" in params:
        r = _conv_ref(x, params["wd"], params["bd"], 2, 0)
        r = _bn_train_ref(r, params["gd"], params["btd"])
    else:
        r = x
    h = _conv_ref(x, params["w1"], params["b1"], first_stride, 1)
    h = jnp.maximum(_bn_train_ref(h, params["g1"], params["bt1"]), 0.0)
    h = _conv_ref(h, params["w2"], params["b2"], 1, 1)
    h = _bn_train_ref(h, params["g2"], params["bt2"])
    h = jnp.maximum(h + r, 0.0)
    return jnp.transpose(h, (0, 3, 1, 2))


# ----------------------------------------------------------------------------- params

def init_block_params(key, cin, cout):
    ks = jax.random.split(key, 12)
    p = {
        "w1": 0.1 * jax.random.normal(ks[0], (cout, cin, 3, 3), jnp.float32),
        "b1": 0.1 * jax.random.normal(ks[1], (cout,), jnp.float32),
        "g1": 1.0 + 0.1 * jax.random.normal(ks[2], (cout,), jnp.float32),
        "bt1": 0.1 * jax.random.normal(ks[3], (cout,), jnp.float32),
        "w2": 0.1 * jax.random.normal(ks[4], (cout, cout, 3, 3), jnp.float32),
        "b2": 0.1 * jax.random.normal(ks[5], (cout,), jnp.float32),
        "g2": 1.0 + 0.1 * jax.random.normal(ks[6], (cout,), jnp.float32),
        "bt2": 0.1 * jax.random.normal(ks[7], (cout,), jnp.float32),
    }
    if cin != cout:  # Downsample branch
        p.update({
            "wd": 0.1 * jax.random.normal(ks[8], (cout, cin, 1, 1), jnp.float32),
            "bd": 0.1 * jax.random.normal(ks[9], (cout,), jnp.float32),
            "gd": 1.0 + 0.1 * jax.random.normal(ks[10], (cout,), jnp.float32),
            "btd": 0.1 * jax.random.normal(ks[11], (cout,), jnp.float32),
        })
    return p
    # Note: the conv biases b1/b2/bd are kept for reference parity; the Pallas path
    # drops them because training-mode BatchNorm cancels them exactly.


# ----------------------------------------------------------------------------- main

if __name__ == "__main__":
    key = jax.random.PRNGKey(0)
    kx, kp1, kp2 = jax.random.split(key, 3)

    # case 1: channel expansion + stride 2 (exercises Downsample, the stride-2 phase
    # path, multi-tile halo row tiling and the chunked accumulator); f32 MXU for a
    # tight numerical check.
    x1 = jax.random.normal(kx, (2, 4, 16, 16), jnp.float32)          # NCHW
    params1 = init_block_params(kp1, cin=4, cout=8)
    out1 = jax.block_until_ready(
        block_forward(x1, params1, first_stride=2, mxu_dtype=jnp.float32,
                      row_tile_target=32, sub_rows_target=16))
    ref1 = block_forward_ref(x1, params1, first_stride=2)
    assert out1.shape == (2, 8, 8, 8), out1.shape
    assert jnp.allclose(out1, ref1, atol=1e-3, rtol=1e-3), float(jnp.abs(out1 - ref1).max())

    # case 2: identity residual (in_channels == out_channels, stride 1), f32 MXU,
    # whole-image tiles (nt == 1 fast path).
    x2 = jax.random.normal(kx, (2, 8, 8, 8), jnp.float32)
    params2 = init_block_params(kp2, cin=8, cout=8)
    out2 = jax.block_until_ready(
        block_forward(x2, params2, first_stride=1, mxu_dtype=jnp.float32))
    ref2 = block_forward_ref(x2, params2, first_stride=1)
    assert out2.shape == (2, 8, 8, 8), out2.shape
    assert jnp.allclose(out2, ref2, atol=1e-3, rtol=1e-3), float(jnp.abs(out2 - ref2).max())

    # case 3: default performance configuration (bf16 MXU inputs/intermediates/residual,
    # f32 accumulation, per-generation tile sizing).
    out3 = jax.block_until_ready(block_forward(x1, params1, first_stride=2))
    assert out3.shape == (2, 8, 8, 8), out3.shape
    assert jnp.allclose(out3, ref1, atol=1e-1, rtol=1e-1), float(jnp.abs(out3 - ref1).max())

    print("KERNEL_OK")
</pallas_src>

<mosaic_0001>
module attributes {stable_mosaic.version = 11 : i64} {
  func.func @_conv_stats_kernel(%arg0: i32, %arg1: memref<1x1x4x8x4xf32, #tpu.memory_space<vmem>>, %arg2: memref<1x4x128xf32, #tpu.memory_space<vmem>>, %arg3: memref<1x4x8x128xf32, #tpu.memory_space<vmem>>, %arg4: memref<1x8x128xf32, #tpu.memory_space<vmem>>) attributes {dimension_semantics = [#tpu.dimension_semantics<parallel>], iteration_bounds = array<i64: 4>, scalar_prefetch = 0 : i64, scratch_operands = 0 : i64, tpu.core_type = #tpu.core_type<tc>, window_params = [{transform_indices = @transform_0, window_bounds = array<i64: 1, 1, 4, 8, 4>}, {pipeline_mode = #tpu.pipeline_mode<synchronous>, transform_indices = @transform_1, window_bounds = array<i64: 1, 4, 128>}, {transform_indices = @transform_2, window_bounds = array<i64: 1, 4, 8, 128>}, {transform_indices = @transform_3, window_bounds = array<i64: 1, 8, 128>}]} {
    %cst = arith.constant 0.000000e+00 : f32
    %0 = vector.broadcast %cst : f32 to vector<1x128xf32>
    %cst_0 = arith.constant 0.000000e+00 : f32
    %1 = vector.broadcast %cst_0 : f32 to vector<1x128xf32>
    %cst_1 = arith.constant 0.000000e+00 : f32
    %2 = vector.broadcast %cst_1 : f32 to vector<16x128xf32>
    %c0 = arith.constant 0 : index
    %c0_2 = arith.constant 0 : index
    %c0_3 = arith.constant 0 : index
    %c0_4 = arith.constant 0 : index
    %c0_5 = arith.constant 0 : index
    %3 = vector.load %arg1[%c0, %c0_2, %c0_3, %c0_4, %c0_5] : memref<1x1x4x8x4xf32, #tpu.memory_space<vmem>>, vector<1x1x2x8x4xf32>
    %4 = vector.shape_cast %3 : vector<1x1x2x8x4xf32> to vector<2x8x4xf32>
    %5 = vector.shape_cast %4 : vector<2x8x4xf32> to vector<16x4xf32>
    %c0_6 = arith.constant 0 : index
    %c0_7 = arith.constant 0 : index
    %c0_8 = arith.constant 0 : index
    %6 = vector.load %arg2[%c0_6, %c0_7, %c0_8] : memref<1x4x128xf32, #tpu.memory_space<vmem>>, vector<1x4x128xf32>
    %7 = vector.shape_cast %6 : vector<1x4x128xf32> to vector<4x128xf32>
    %cst_9 = arith.constant dense<0.000000e+00> : vector<16x128xf32>
    %8 = tpu.matmul %5, %7, %cst_9 {dimension_numbers = #tpu.dot_dimension_numbers<[1], [0], [0], [1], [0, 0, 1, 1], [], []>} : vector<16x4xf32>, vector<4x128xf32>, vector<16x128xf32> -> vector<16x128xf32>
    %9 = arith.addf %2, %8 : vector<16x128xf32>
    %10 = vector.shape_cast %9 : vector<16x128xf32> to vector<2x8x128xf32>
    %c0_10 = arith.constant 0 : index
    %c0_11 = arith.constant 0 : index
    %c0_12 = arith.constant 0 : index
    %c0_13 = arith.constant 0 : index
    %11 = vector.load %arg3[%c0_10, %c0_11, %c0_12, %c0_13] : memref<1x4x8x128xf32, #tpu.memory_space<vmem>>, vector<1x2x8x128xf32>
    %12 = vector.shape_cast %11 : vector<1x2x8x128xf32> to vector<2x8x128xf32>
    %13 = vector.shape_cast %10 : vector<2x8x128xf32> to vector<1x2x8x128xf32>
    tpu.vector_store %arg3[%c0_10, %c0_11, %c0_12, %c0_13], %13 {strides = array<i32>} : memref<1x4x8x128xf32, #tpu.memory_space<vmem>>, vector<1x2x8x128xf32>,
    %cst_14 = arith.constant dense<0.000000e+00> : vector<128xf32>
    %14 = vector.multi_reduction <add>, %9, %cst_14 [0] : vector<16x128xf32> to vector<128xf32>
    %15 = vector.shape_cast %14 : vector<128xf32> to vector<1x128xf32>
    %16 = arith.addf %0, %15 : vector<1x128xf32>
    %17 = arith.mulf %9, %9 : vector<16x128xf32>
    %cst_15 = arith.constant dense<0.000000e+00> : vector<128xf32>
    %18 = vector.multi_reduction <add>, %17, %cst_15 [0] : vector<16x128xf32> to vector<128xf32>
    %19 = vector.shape_cast %18 : vector<128xf32> to vector<1x128xf32>
    %20 = arith.addf %1, %19 : vector<1x128xf32>
    %cst_16 = arith.constant 0.000000e+00 : f32
    %21 = vector.broadcast %cst_16 : f32 to vector<16x128xf32>
    %c0_17 = arith.constant 0 : index
    %c0_18 = arith.constant 0 : index
    %c2 = arith.constant 2 : index
    %c0_19 = arith.constant 0 : index
    %c0_20 = arith.constant 0 : index
    %22 = vector.load %arg1[%c0_17, %c0_18, %c2, %c0_19, %c0_20] : memref<1x1x4x8x4xf32, #tpu.memory_space<vmem>>, vector<1x1x2x8x4xf32>
    %23 = vector.shape_cast %22 : vector<1x1x2x8x4xf32> to vector<2x8x4xf32>
    %24 = vector.shape_cast %23 : vector<2x8x4xf32> to vector<16x4xf32>
    %c0_21 = arith.constant 0 : index
    %c0_22 = arith.constant 0 : index
    %c0_23 = arith.constant 0 : index
    %25 = vector.load %arg2[%c0_21, %c0_22, %c0_23] : memref<1x4x128xf32, #tpu.memory_space<vmem>>, vector<1x4x128xf32>
    %26 = vector.shape_cast %25 : vector<1x4x128xf32> to vector<4x128xf32>
    %cst_24 = arith.constant dense<0.000000e+00> : vector<16x128xf32>
    %27 = tpu.matmul %24, %26, %cst_24 {dimension_numbers = #tpu.dot_dimension_numbers<[1], [0], [0], [1], [0, 0, 1, 1], [], []>} : vector<16x4xf32>, vector<4x128xf32>, vector<16x128xf32> -> vector<16x128xf32>
    %28 = arith.addf %21, %27 : vector<16x128xf32>
    %29 = vector.shape_cast %28 : vector<16x128xf32> to vector<2x8x128xf32>
    %c0_25 = arith.constant 0 : index
    %c2_26 = arith.constant 2 : index
    %c0_27 = arith.constant 0 : index
    %c0_28 = arith.constant 0 : index
    %30 = vector.load %arg3[%c0_25, %c2_26, %c0_27, %c0_28] : memref<1x4x8x128xf32, #tpu.memory_space<vmem>>, vector<1x2x8x128xf32>
    %31 = vector.shape_cast %30 : vector<1x2x8x128xf32> to vector<2x8x128xf32>
    %32 = vector.shape_cast %29 : vector<2x8x128xf32> to vector<1x2x8x128xf32>
    tpu.vector_store %arg3[%c0_25, %c2_26, %c0_27, %c0_28], %32 {strides = array<i32>} : memref<1x4x8x128xf32, #tpu.memory_space<vmem>>, vector<1x2x8x128xf32>,
    %cst_29 = arith.constant dense<0.000000e+00> : vector<128xf32>
    %33 = vector.multi_reduction <add>, %28, %cst_29 [0] : vector<16x128xf32> to vector<128xf32>
    %34 = vector.shape_cast %33 : vector<128xf32> to vector<1x128xf32>
    %35 = arith.addf %16, %34 : vector<1x128xf32>
    %36 = arith.mulf %28, %28 : vector<16x128xf32>
    %cst_30 = arith.constant dense<0.000000e+00> : vector<128xf32>
    %37 = vector.multi_reduction <add>, %36, %cst_30 [0] : vector<16x128xf32> to vector<128xf32>
    %38 = vector.shape_cast %37 : vector<128xf32> to vector<1x128xf32>
    %39 = arith.addf %20, %38 : vector<1x128xf32>
    %40 = tpu.iota {dimensions = array<i32: 0>} : vector<8x128xi32>
    %c0_i32 = arith.constant 0 : i32
    %41 = vector.broadcast %c0_i32 : i32 to vector<8x128xi32>
    %42 = arith.cmpi eq, %40, %41 : vector<8x128xi32>
    %43 = vector.shape_cast %35 : vector<1x128xf32> to vector<1x128xf32>
    %44 = vector.broadcast %43 : vector<1x128xf32> to vector<8x128xf32>
    %c1_i32 = arith.constant 1 : i32
    %45 = vector.broadcast %c1_i32 : i32 to vector<8x128xi32>
    %46 = arith.cmpi eq, %40, %45 : vector<8x128xi32>
    %47 = vector.shape_cast %39 : vector<1x128xf32> to vector<1x128xf32>
    %48 = vector.broadcast %47 : vector<1x128xf32> to vector<8x128xf32>
    %cst_31 = arith.constant 0.000000e+00 : f32
    %49 = vector.broadcast %cst_31 : f32 to vector<8x128xf32>
    %50 = arith.select %46, %48, %49 : vector<8x128xi1>, vector<8x128xf32>
    %51 = arith.select %42, %44, %50 : vector<8x128xi1>, vector<8x128xf32>
    %c0_32 = arith.constant 0 : index
    %c0_33 = arith.constant 0 : index
    %c0_34 = arith.constant 0 : index
    %52 = vector.load %arg4[%c0_32, %c0_33, %c0_34] : memref<1x8x128xf32, #tpu.memory_space<vmem>>, vector<1x8x128xf32>
    %53 = vector.shape_cast %52 : vector<1x8x128xf32> to vector<8x128xf32>
    %54 = vector.shape_cast %51 : vector<8x128xf32> to vector<1x8x128xf32>
    tpu.vector_store %arg4[%c0_32, %c0_33, %c0_34], %54 {strides = array<i32>} : memref<1x8x128xf32, #tpu.memory_space<vmem>>, vector<1x8x128xf32>,
    return
  }
  func.func @transform_0(%arg0: i32) -> (i32, i32, i32, i32, i32) {
    %c0_i32 = arith.constant 0 : i32
    %c0_i32_0 = arith.constant 0 : i32
    %c0_i32_1 = arith.constant 0 : i32
    %c0_i32_2 = arith.constant 0 : i32
    %c0_i32_3 = arith.constant 0 : i32
    return %arg0, %c0_i32, %c0_i32_0, %c0_i32_1, %c0_i32_2 : i32, i32, i32, i32, i32
  }
  func.func @transform_1(%arg0: i32) -> (i32, i32, i32) {
    %c0_i32 = arith.constant 0 : i32
    %c0_i32_0 = arith.constant 0 : i32
    %c0_i32_1 = arith.constant 0 : i32
    %c0_i32_2 = arith.constant 0 : i32
    return %c0_i32, %c0_i32_0, %c0_i32_1 : i32, i32, i32
  }
  func.func @transform_2(%arg0: i32) -> (i32, i32, i32, i32) {
    %c0_i32 = arith.constant 0 : i32
    %c0_i32_0 = arith.constant 0 : i32
    %c0_i32_1 = arith.constant 0 : i32
    %c0_i32_2 = arith.constant 0 : i32
    return %arg0, %c0_i32, %c0_i32_0, %c0_i32_1 : i32, i32, i32, i32
  }
  func.func @transform_3(%arg0: i32) -> (i32, i32, i32) {
    %c0_i32 = arith.constant 0 : i32
    %c0_i32_0 = arith.constant 0 : i32
    %c0_i32_1 = arith.constant 0 : i32
    return %arg0, %c0_i32, %c0_i32_0 : i32, i32, i32
  }
}

</mosaic_0001>

<llo_original>
// kernel: tpu_custom_call.1
$region0: #{tpu_custom_call.1}
  #allocation0 [shape = 'u32[]', space=smem, size = 0x4, offset = 0x4, fixed_abs, tag = 'smem constant byte address 0x4 - core index']
  #allocation1 [shape = 'u32[144,128]{1,0:T(1,128)}', space=vmem, size = 0x12000, scoped, tag = 'internal scratch']
  %s0 = inlined_call_operand.vmem [shape: f32[4,1,4,8,4], index: 0, kind: input, shape index: {}]
  %s1 = inlined_call_operand.vmem [shape: f32[1,4,128], index: 1, kind: input, shape index: {}]
  %s2 = inlined_call_operand.hbm [shape: f32[4,4,8,128], index: 2, kind: output, shape index: {0}]
  %s3 = inlined_call_operand.hbm [shape: f32[4,8,128], index: 3, kind: output, shape index: {1}]
  %4 = xla_tuple %s2, %s3
  %s5 = sld [smem:[#allocation0]]
  $region49: #{tpu_custom_call.1} parent=0
    _
  %s7 = ssub.s32 1, %s5
  %s8 = scalar_select 0, %s7, %s5
  $region1: #{tpu_custom_call.1} parent=0
    #allocation2 [shape = 'u8[32768]{0}', space=vmem, size = 0x8000, scoped, tag = 'output window, operand 0']
    #allocation3 [shape = 's32[2]{0}', space=sflag, size = 0x8, scoped, tag = 'scoped memory for tpu_custom_call.1']
    #allocation4 [shape = 'u8[8192]{0}', space=vmem, size = 0x2000, scoped, tag = 'output window, operand 1']
    #allocation5 [shape = 's32[2]{0}', space=sflag, size = 0x8, scoped, tag = 'scoped memory for tpu_custom_call.1']
    %9 = vsyncpa [#allocation3], 0
    %s10 = scalar_lea.sflag [#allocation3], 1
    %11 = vsyncpa %s10, 0
    %12 = vsyncpa [#allocation5], 0
    %s13 = scalar_lea.sflag [#allocation5], 1
    %14 = vsyncpa %s13, 0
    loop: start=0, step=1, limit=6
    $region2: #{tpu_custom_call.1} parent=1 // loop_pre_header
      _
    $region3: #{tpu_custom_call.1} parent=1 // loop_header
      %s16 = sphi 0, %s20
      %p17 = scmp.ge.s32.totalorder %s16, 6
      %s26 = sphi 0, %s28
      %s29 = sphi 0, %s26
      %s30 = sphi 0, %s29
      %s46 = sphi 0, %s30
      %s50 = sphi 0, %s50
      %s52 = sphi 0, %s50
      %s53 = sphi 0, %s52
      %s67 = sphi 0, %s53
      %s73 = sphi 0, %s75
      %s76 = sphi 0, %s73
      %s77 = sphi 0, %s76
      %s93 = sphi 0, %s77
      %s99 = sphi 0, %s101
      %s102 = sphi 0, %s99
      %s103 = sphi 0, %s102
      %s119 = sphi 0, %s103
    $region4: #{tpu_custom_call.1} parent=1 // loop_header_branch
      %19 = sbr.rel (%p17) target = $region8
    $region5: #{tpu_custom_call.1} parent=1 // loop_body
      %s21 = ssub.s32 %s16, 1
      %s22 = ssub.s32 %s16, 2
      %s23 = sadd.s32 %s16, 1
      %s24 = ssub.s32 %s16, %s23
      %p25 = scmp.eq.s32.totalorder %s24, 0
      %s27 = sadd.s32 %s26, 1
      %s28 = scalar_select %p25, %s26, %s27
      %p31 = pneg %p25
      %p32 = scmp.eq.s32.totalorder %s16, 3
      %p33 = por %p31, %p32
      %p34 = scmp.ne.s32.totalorder %s26, %s29
      %p35 = scmp.eq.s32.totalorder %s16, 0
      %p36 = por %p34, %p35
      %p37 = scmp.ne.s32.totalorder %s26, %s29
      %p38 = scmp.eq.s32.totalorder %s21, 3
      %p39 = por %p37, %p38
      %p40 = scmp.ne.s32.totalorder %s29, %s30
      %p41 = scmp.eq.s32.totalorder %s21, 0
      %p42 = por %p40, %p41
      %p43 = scmp.ne.s32.totalorder %s29, %s30
      %p44 = scmp.eq.s32.totalorder %s22, 3
      %p45 = por %p43, %p44
      %p47 = scmp.ne.s32.totalorder %s30, %s46
      %p48 = scmp.eq.s32.totalorder %s22, 0
      %p49 = por %p47, %p48
      %s51 = sadd.s32 %s50, 1
      %p54 = scmp.eq.s32.totalorder %s16, 3
      %p55 = scmp.ne.s32.totalorder %s50, %s52
      %p56 = scmp.eq.s32.totalorder %s16, 0
      %p57 = por %p55, %p56
      %p58 = scmp.ne.s32.totalorder %s50, %s52
      %p59 = scmp.eq.s32.totalorder %s21, 3
      %p60 = por %p58, %p59
      %p61 = scmp.ne.s32.totalorder %s52, %s53
      %p62 = scmp.eq.s32.totalorder %s21, 0
      %p63 = por %p61, %p62
      %p64 = scmp.ne.s32.totalorder %s52, %s53
      %p65 = scmp.eq.s32.totalorder %s22, 3
      %p66 = por %p64, %p65
      %p68 = scmp.ne.s32.totalorder %s53, %s67
      %p69 = scmp.eq.s32.totalorder %s22, 0
      %p70 = por %p68, %p69
      %s71 = ssub.s32 %s16, %s23
      %p72 = scmp.eq.s32.totalorder %s71, 0
      %s74 = sadd.s32 %s73, 1
      %s75 = scalar_select %p72, %s73, %s74
      %p78 = pneg %p72
      %p79 = scmp.eq.s32.totalorder %s16, 3
      %p80 = por %p78, %p79
      %p81 = scmp.ne.s32.totalorder %s73, %s76
      %p82 = scmp.eq.s32.totalorder %s16, 0
      %p83 = por %p81, %p82
      %p84 = scmp.ne.s32.totalorder %s73, %s76
      %p85 = scmp.eq.s32.totalorder %s21, 3
      %p86 = por %p84, %p85
      %p87 = scmp.ne.s32.totalorder %s76, %s77
      %p88 = scmp.eq.s32.totalorder %s21, 0
      %p89 = por %p87, %p88
      %p90 = scmp.ne.s32.totalorder %s76, %s77
      %p91 = scmp.eq.s32.totalorder %s22, 3
      %p92 = por %p90, %p91
      %p94 = scmp.ne.s32.totalorder %s77, %s93
      %p95 = scmp.eq.s32.totalorder %s22, 0
      %p96 = por %p94, %p95
      %s97 = ssub.s32 %s16, %s23
      %p98 = scmp.eq.s32.totalorder %s97, 0
      %s100 = sadd.s32 %s99, 1
      %s101 = scalar_select %p98, %s99, %s100
      %p104 = pneg %p98
      %p105 = scmp.eq.s32.totalorder %s16, 3
      %p106 = por %p104, %p105
      %p107 = scmp.ne.s32.totalorder %s99, %s102
      %p108 = scmp.eq.s32.totalorder %s16, 0
      %p109 = por %p107, %p108
      %p110 = scmp.ne.s32.totalorder %s99, %s102
      %p111 = scmp.eq.s32.totalorder %s21, 3
      %p112 = por %p110, %p111
      %p113 = scmp.ne.s32.totalorder %s102, %s103
      %p114 = scmp.eq.s32.totalorder %s21, 0
      %p115 = por %p113, %p114
      %p116 = scmp.ne.s32.totalorder %s102, %s103
      %p117 = scmp.eq.s32.totalorder %s22, 3
      %p118 = por %p116, %p117
      %p120 = scmp.ne.s32.totalorder %s103, %s119
      %p121 = scmp.eq.s32.totalorder %s22, 0
      %p122 = por %p120, %p121
      %p123 = scmp.le.s32.totalorder 1, %s16
      %p124 = scmp.lt.s32.totalorder %s16, 5
      %p125 = pnand %p123, %p124
      %p126 = pneg %p125
      // Predicated region
      $region9: #{tpu_custom_call.1} parent=5 // pred_check
        _
      $region10: #{tpu_custom_call.1} parent=5 // pred_check_branch
        %128 = sbr.rel (%p125) target = $region12
      $region11: #{tpu_custom_call.1} parent=5 // pred_region
        %s129 = ssub.s32 %s16, 1
        // Predicated region
        $region13: #{tpu_custom_call.1} parent=11 // pred_check
          %p130 = pneg %p63
        $region14: #{tpu_custom_call.1} parent=11 // pred_check_branch
          %132 = sbr.rel (%p130) target = $region16
        $region15: #{tpu_custom_call.1} parent=11 // pred_region
          _
        $region16: #{tpu_custom_call.1} parent=11 // pred_fallthru
          _
      $region12: #{tpu_custom_call.1} parent=5 // pred_fallthru
        _
      %p133 = scmp.lt.s32.totalorder %s16, 4
      // Predicated region
      $region17: #{tpu_custom_call.1} parent=5 // pred_check
        %p134 = pneg %p133
      $region18: #{tpu_custom_call.1} parent=5 // pred_check_branch
        %136 = sbr.rel (%p134) target = $region20
      $region19: #{tpu_custom_call.1} parent=5 // pred_region
        // Predicated region
        $region21: #{tpu_custom_call.1} parent=19 // pred_check
          %p137 = pneg %p36
        $region22: #{tpu_custom_call.1} parent=19 // pred_check_branch
          %139 = sbr.rel (%p137) target = $region24
        $region23: #{tpu_custom_call.1} parent=19 // pred_region
          %p140 = scmp.lt.s32.totalorder %s16, 3
          %s141 = scalar_select %p140, %s16, 3
          %s142 = smul.addr %s141, 4
          %s143 = smul.addr %s142, 8
          %s144 = scalar_lea.vmem %s0, %s143
        $region24: #{tpu_custom_call.1} parent=19 // pred_fallthru
          _
      $region20: #{tpu_custom_call.1} parent=5 // pred_fallthru
        _
      %p145 = scmp.le.s32.totalorder 1, %s16
      %p146 = scmp.lt.s32.totalorder %s16, 5
      %p147 = pnand %p145, %p146
      %p148 = pneg %p147
      // Predicated region
      $region25: #{tpu_custom_call.1} parent=5 // pred_check
        _
      $region26: #{tpu_custom_call.1} parent=5 // pred_check_branch
        %150 = sbr.rel (%p147) target = $region28
      $region27: #{tpu_custom_call.1} parent=5 // pred_region
        %s151 = ssub.s32 %s16, 1
        %p152 = scmp.lt.s32.totalorder %s21, 3
        %s153 = scalar_select %p152, %s21, 3
        %s154 = smul.addr %s153, 4
        %s155 = smul.addr %s154, 8
        %s156 = scalar_lea.vmem %s0, %s155
        %p157 = pneg %p42
        %p158 = pneg %p39
        %p159 = pneg %p63
        %p160 = pneg %p60
        %p161 = pneg %p89
        %p162 = pneg %p86
        %s163 = sand.u32 %s76, 1
        %s164 = scalar_lea.sflag [#allocation3], %s163
        %s165 = sand.u32 %s76, 1
        %s166 = smul.addr %s165, 32
        %s167 = scalar_lea.vmem [#allocation2], %s166
        %p168 = pneg %p115
        %p169 = pneg %p112
        %s170 = sand.u32 %s102, 1
        %s171 = scalar_lea.sflag [#allocation5], %s170
        %s172 = sand.u32 %s102, 1
        %s173 = smul.addr %s172, 8
        %s174 = scalar_lea.vmem [#allocation4], %s173
        %p175 = scmp.lt.s32.totalorder %s21, 3
        %s176 = scalar_select %p175, %s21, 3
        %s177 = smul.addr %s176, 4
        %s178 = smul.addr %s177, 8
        %s179 = scalar_lea.vmem %s0, %s178
        %v180 = vld [vmem:[%s179] sm:$0xff]
        %v181 = vld [vmem:[%s179 + $0x8] sm:$0xff]
        %v182 = vld [vmem:[%s1] sm:$0xf]
        %vm183 = vcmask 31744
        %v185 = vsel %vm183, %v180, 0
        %v188 = vsel %vm183, %v181, 0
        %vm190 = vcmask 1043456
        %v192 = vsel %vm190, %v182, 0
        %194 = vmatprep.subr.mxu0 0.0
        %195 = vmatpush1.msra.mxu0 0.0
        %196 = vmatprep.subr.mxu0 0.0
        %197 = vmatpush1.msra.mxu0 0.0
        %198 = vmatprep.subr.mxu0 0.0
        %199 = vmatpush1.msra.mxu0 0.0
        %200 = vmatprep.subr.mxu0 0.0
        %201 = vmatpush1.msra.mxu0 0.0
        %202 = vmatprep.subr.mxu0 0.0
        %203 = vmatpush1.msra.mxu0 0.0
        %204 = vmatprep.subr.mxu0 0.0
        %205 = vmatpush1.msra.mxu0 0.0
        %206 = vmatprep.subr.mxu0 0.0
        %207 = vmatpush1.msra.mxu0 0.0
        %208 = vmatprep.subr.mxu0 0.0
        %209 = vmatpush1.msra.mxu0 0.0
        %210 = vmatprep.subr.mxu0 0.0
        %211 = vmatpush1.msra.mxu0 0.0
        %212 = vmatprep.subr.mxu0 0.0
        %213 = vmatpush1.msra.mxu0 0.0
        %214 = vmatprep.subr.mxu0 0.0
        %215 = vmatpush1.msra.mxu0 0.0
        %216 = vmatprep.subr.mxu0 0.0
        %217 = vmatpush1.msra.mxu0 0.0
        %218 = vmatprep.subr.mxu0 0.0
        %219 = vmatpush1.msra.mxu0 0.0
        %220 = vmatprep.subr.mxu0 0.0
        %221 = vmatpush1.msra.mxu0 0.0
        %222 = vmatprep.subr.mxu0 0.0
        %223 = vmatpush1.msra.mxu0 0.0
        %224 = vmatprep.subr.mxu0 0.0
        %225 = vmatpush1.msra.mxu0 %v192
        %226 = vmatprep.subr.mxu0 0.0
        %227 = vmatpush2.msra.mxu0 0.0
        %228 = vmatprep.subr.mxu0 0.0
        %229 = vmatpush2.msra.mxu0 0.0
        %230 = vmatprep.subr.mxu0 0.0
        %231 = vmatpush2.msra.mxu0 0.0
        %232 = vmatprep.subr.mxu0 0.0
        %233 = vmatpush2.msra.mxu0 0.0
        %234 = vmatprep.subr.mxu0 0.0
        %235 = vmatpush2.msra.mxu0 0.0
        %236 = vmatprep.subr.mxu0 0.0
        %237 = vmatpush2.msra.mxu0 0.0
        %238 = vmatprep.subr.mxu0 0.0
        %239 = vmatpush2.msra.mxu0 0.0
        %240 = vmatprep.subr.mxu0 0.0
        %241 = vmatpush2.msra.mxu0 0.0
        %242 = vmatprep.subr.mxu0 0.0
        %243 = vmatpush2.msra.mxu0 0.0
        %244 = vmatprep.subr.mxu0 0.0
        %245 = vmatpush2.msra.mxu0 0.0
        %246 = vmatprep.subr.mxu0 0.0
        %247 = vmatpush2.msra.mxu0 0.0
        %248 = vmatprep.subr.mxu0 0.0
        %249 = vmatpush2.msra.mxu0 0.0
        %250 = vmatprep.subr.mxu0 0.0
        %251 = vmatpush2.msra.mxu0 0.0
        %252 = vmatprep.subr.mxu0 0.0
        %253 = vmatpush2.msra.mxu0 0.0
        %254 = vmatprep.subr.mxu0 0.0
        %255 = vmatpush2.msra.mxu0 0.0
        %256 = vmatprep.subr.mxu0 0.0
        %257 = vmatpush2.msra.mxu0 0.0
        %258 = vmatprep.mubr.f32.mxu0 0.0
        %259 = vmatmul.mubr.f32.gmra.mxu0 %v185
        %v260 = vpop.f32.mrf.mxu0
        %v261 = vadd.f32 0.0, %v260
        %v262 = vpop.f32.mrf.mxu0
        %263 = vmatprep.mubr.f32.mxu0 0.0
        %264 = vmatmul.mubr.f32.gmra.mxu0 %v188
        %v265 = vpop.f32.mrf.mxu0
        %v266 = vadd.f32 0.0, %v265
        %v267 = vpop.f32.mrf.mxu0
        %268 = vdwg.mxu0
        %269 = vst [vmem:[%s167] sm:$0xff] %v261
        %270 = vst [vmem:[%s167 + $0x8] sm:$0xff] %v266
        %v271 = vadd.f32 %v261, %v266
        %v272 = vrot.slane %v271, 4
        %v273 = vadd.f32 %v271, %v272
        %v274 = vrot.slane %v273, 2
        %v275 = vadd.f32 %v273, %v274
        %v276 = vrot.slane %v275, 1
        %v277 = vadd.f32 %v275, %v276
        %v278 = vadd.f32 %v277, 0.0
        %v279 = vmul.f32 %v261, %v261
        %v280 = vmul.f32 %v266, %v266
        %v281 = vadd.f32 %v279, %v280
        %v282 = vrot.slane %v281, 4
        %v283 = vadd.f32 %v281, %v282
        %v284 = vrot.slane %v283, 2
        %v285 = vadd.f32 %v283, %v284
        %v286 = vrot.slane %v285, 1
        %v287 = vadd.f32 %v285, %v286
        %v288 = vadd.f32 %v287, 0.0
        %s289 = scalar_lea.vmem %s179, 16
        %v290 = vld [vmem:[%s289] sm:$0xff]
        %v291 = vld [vmem:[%s289 + $0x8] sm:$0xff]
        %v292 = vld [vmem:[%s1] sm:$0xf]
        %v294 = vsel %vm183, %v290, 0
        %v297 = vsel %vm183, %v291, 0
        %v300 = vsel %vm190, %v292, 0
        %302 = vmatprep.subr.mxu0 0.0
        %303 = vmatpush1.msra.mxu0 0.0
        %304 = vmatprep.subr.mxu0 0.0
        %305 = vmatpush1.msra.mxu0 0.0
        %306 = vmatprep.subr.mxu0 0.0
        %307 = vmatpush1.msra.mxu0 0.0
        %308 = vmatprep.subr.mxu0 0.0
        %309 = vmatpush1.msra.mxu0 0.0
        %310 = vmatprep.subr.mxu0 0.0
        %311 = vmatpush1.msra.mxu0 0.0
        %312 = vmatprep.subr.mxu0 0.0
        %313 = vmatpush1.msra.mxu0 0.0
        %314 = vmatprep.subr.mxu0 0.0
        %315 = vmatpush1.msra.mxu0 0.0
        %316 = vmatprep.subr.mxu0 0.0
        %317 = vmatpush1.msra.mxu0 0.0
        %318 = vmatprep.subr.mxu0 0.0
        %319 = vmatpush1.msra.mxu0 0.0
        %320 = vmatprep.subr.mxu0 0.0
        %321 = vmatpush1.msra.mxu0 0.0
        %322 = vmatprep.subr.mxu0 0.0
        %323 = vmatpush1.msra.mxu0 0.0
        %324 = vmatprep.subr.mxu0 0.0
        %325 = vmatpush1.msra.mxu0 0.0
        %326 = vmatprep.subr.mxu0 0.0
        %327 = vmatpush1.msra.mxu0 0.0
        %328 = vmatprep.subr.mxu0 0.0
        %329 = vmatpush1.msra.mxu0 0.0
        %330 = vmatprep.subr.mxu0 0.0
        %331 = vmatpush1.msra.mxu0 0.0
        %332 = vmatprep.subr.mxu0 0.0
        %333 = vmatpush1.msra.mxu0 %v300
        %334 = vmatprep.subr.mxu0 0.0
        %335 = vmatpush2.msra.mxu0 0.0
        %336 = vmatprep.subr.mxu0 0.0
        %337 = vmatpush2.msra.mxu0 0.0
        %338 = vmatprep.subr.mxu0 0.0
        %339 = vmatpush2.msra.mxu0 0.0
        %340 = vmatprep.subr.mxu0 0.0
        %341 = vmatpush2.msra.mxu0 0.0
        %342 = vmatprep.subr.mxu0 0.0
        %343 = vmatpush2.msra.mxu0 0.0
        %344 = vmatprep.subr.mxu0 0.0
        %345 = vmatpush2.msra.mxu0 0.0
        %346 = vmatprep.subr.mxu0 0.0
        %347 = vmatpush2.msra.mxu0 0.0
        %348 = vmatprep.subr.mxu0 0.0
        %349 = vmatpush2.msra.mxu0 0.0
        %350 = vmatprep.subr.mxu0 0.0
        %351 = vmatpush2.msra.mxu0 0.0
        %352 = vmatprep.subr.mxu0 0.0
        %353 = vmatpush2.msra.mxu0 0.0
        %354 = vmatprep.subr.mxu0 0.0
        %355 = vmatpush2.msra.mxu0 0.0
        %356 = vmatprep.subr.mxu0 0.0
        %357 = vmatpush2.msra.mxu0 0.0
        %358 = vmatprep.subr.mxu0 0.0
        %359 = vmatpush2.msra.mxu0 0.0
        %360 = vmatprep.subr.mxu0 0.0
        %361 = vmatpush2.msra.mxu0 0.0
        %362 = vmatprep.subr.mxu0 0.0
        %363 = vmatpush2.msra.mxu0 0.0
        %364 = vmatprep.subr.mxu0 0.0
        %365 = vmatpush2.msra.mxu0 0.0
        %366 = vmatprep.mubr.f32.mxu0 0.0
        %367 = vmatmul.mubr.f32.gmra.mxu0 %v294
        %v368 = vpop.f32.mrf.mxu0
        %v369 = vadd.f32 0.0, %v368
        %v370 = vpop.f32.mrf.mxu0
        %371 = vmatprep.mubr.f32.mxu0 0.0
        %372 = vmatmul.mubr.f32.gmra.mxu0 %v297
        %v373 = vpop.f32.mrf.mxu0
        %v374 = vadd.f32 0.0, %v373
        %v375 = vpop.f32.mrf.mxu0
        %376 = vdwg.mxu0
        %s377 = scalar_lea.vmem %s167, 16 [#allocation2]
        %378 = vst [vmem:[%s377] sm:$0xff] %v369
        %379 = vst [vmem:[%s377 + $0x8] sm:$0xff] %v374
        %v380 = vadd.f32 %v369, %v374
        %v381 = vrot.slane %v380, 4
        %v382 = vadd.f32 %v380, %v381
        %v383 = vrot.slane %v382, 2
        %v384 = vadd.f32 %v382, %v383
        %v385 = vrot.slane %v384, 1
        %v386 = vadd.f32 %v384, %v385
        %v387 = vadd.f32 %v278, %v386
        %v388 = vmul.f32 %v369, %v369
        %v389 = vmul.f32 %v374, %v374
        %v390 = vadd.f32 %v388, %v389
        %v391 = vrot.slane %v390, 4
        %v392 = vadd.f32 %v390, %v391
        %v393 = vrot.slane %v392, 2
        %v394 = vadd.f32 %v392, %v393
        %v395 = vrot.slane %v394, 1
        %v396 = vadd.f32 %v394, %v395
        %v397 = vadd.f32 %v288, %v396
        %v398 = vlaneseq
        %v399 = vshrl.u32 %v398, 7
        %vm400 = vcmp.eq.s32.totalorder %v399, 0
        %vm401 = vcmp.eq.s32.totalorder %v399, 1
        %v402 = vsel %vm401, %v397, 0.0
        %v403 = vsel %vm400, %v387, %v402
        %404 = vst [vmem:[%s174] sm:$0xff] %v403
        %s405 = sand.u32 %s76, 1
        %s406 = scalar_lea.sflag [#allocation3], %s405
        %s407 = sand.u32 %s76, 1
        %s408 = smul.addr %s407, 32
        %s409 = scalar_lea.vmem [#allocation2], %s408
        %s410 = sand.u32 %s102, 1
        %s411 = scalar_lea.sflag [#allocation5], %s410
        %s412 = sand.u32 %s102, 1
        %s413 = smul.addr %s412, 8
        %s414 = scalar_lea.vmem [#allocation4], %s413
        // Predicated region
        $region29: #{tpu_custom_call.1} parent=27 // pred_check
          %p415 = pneg %p86
        $region30: #{tpu_custom_call.1} parent=27 // pred_check_branch
          %417 = sbr.rel (%p415) target = $region32
        $region31: #{tpu_custom_call.1} parent=27 // pred_region
          %s419 = ssub.s32 512, 512
          %420 = vsyncadd %s406, %s419
          %s421 = smul.addr %s21, 4
          %s422 = smul.addr %s421, 128
          %s423 = scalar_lea.hbm %s2, %s422
          %s424 = sshll.u32 %s409, 4
          %s425 = int_to_ptr.vmem [resolvable:$true] %s424
          %430 = dma.vmem_to_hbm [thread:$0]  %s425, 512, %s423, %s406, 128, 128, 8
        $region32: #{tpu_custom_call.1} parent=27 // pred_fallthru
          _
        // Predicated region
        $region33: #{tpu_custom_call.1} parent=27 // pred_check
          %p431 = pneg %p112
        $region34: #{tpu_custom_call.1} parent=27 // pred_check_branch
          %433 = sbr.rel (%p431) target = $region36
        $region35: #{tpu_custom_call.1} parent=27 // pred_region
          %s435 = ssub.s32 128, 128
          %436 = vsyncadd %s411, %s435
          %s437 = smul.addr %s21, 128
          %s438 = scalar_lea.hbm %s3, %s437
          %s440 = sshll.u32 %s414, 4
          %s441 = int_to_ptr.vmem [resolvable:$true] %s440
          %443 = dma.vmem_to_hbm [thread:$0]  %s441, 128, %s438, %s411
        $region36: #{tpu_custom_call.1} parent=27 // pred_fallthru
          _
      $region28: #{tpu_custom_call.1} parent=5 // pred_fallthru
        _
      %p444 = scmp.le.s32.totalorder 2, %s16
      // Predicated region
      $region37: #{tpu_custom_call.1} parent=5 // pred_check
        %p445 = pneg %p444
      $region38: #{tpu_custom_call.1} parent=5 // pred_check_branch
        %447 = sbr.rel (%p445) target = $region40
      $region39: #{tpu_custom_call.1} parent=5 // pred_region
        %s448 = ssub.s32 %s16, 2
        // Predicated region
        $region41: #{tpu_custom_call.1} parent=39 // pred_check
          %p449 = pneg %p92
        $region42: #{tpu_custom_call.1} parent=39 // pred_check_branch
          %451 = sbr.rel (%p449) target = $region44
        $region43: #{tpu_custom_call.1} parent=39 // pred_region
          %s452 = sand.u32 %s77, 1
          %s453 = scalar_lea.sflag [#allocation3], %s452
          %s454 = sand.u32 %s77, 1
          %s455 = smul.addr %s454, 32
          %s456 = scalar_lea.vmem [#allocation2], %s455
          %457 = dma.done %s453, 512
        $region44: #{tpu_custom_call.1} parent=39 // pred_fallthru
          _
        // Predicated region
        $region45: #{tpu_custom_call.1} parent=39 // pred_check
          %p458 = pneg %p118
        $region46: #{tpu_custom_call.1} parent=39 // pred_check_branch
          %460 = sbr.rel (%p458) target = $region48
        $region47: #{tpu_custom_call.1} parent=39 // pred_region
          %s461 = sand.u32 %s103, 1
          %s462 = scalar_lea.sflag [#allocation5], %s461
          %s463 = sand.u32 %s103, 1
          %s464 = smul.addr %s463, 8
          %s465 = scalar_lea.vmem [#allocation4], %s464
          %466 = dma.done %s462, 128
        $region48: #{tpu_custom_call.1} parent=39 // pred_fallthru
          _
      $region40: #{tpu_custom_call.1} parent=5 // pred_fallthru
        _
    $region6: #{tpu_custom_call.1} parent=1 // loop_footer
      %s20 = sadd.s32 1, %s16
    $region7: #{tpu_custom_call.1} parent=1 // loop_footer_branch
      %15 = sbr.rel target = $region3
    $region8: #{tpu_custom_call.1} parent=1 // loop_exit
      _
    %467 = vsyncpa [#allocation3], 1
    %s468 = scalar_lea.sflag [#allocation3], 1
    %469 = vsyncpa %s468, 1
    %470 = vsyncpa [#allocation5], 1
    %s471 = scalar_lea.sflag [#allocation5], 1
    %472 = vsyncpa %s471, 1

</llo_original>
